<compile_context>
chip_gen: v7x
topology: tpu7x:2x2x1
jax: 0.10.0
libtpu: 0.0.40
codegen_flags: <defaults>
</compile_context>

<pallas_src>
import jax
import jax.numpy as jnp
from jax import lax
from jax.experimental import pallas as pl
from jax.experimental.pallas import tpu as pltpu

EPS = 1e-5  # nn.LayerNorm default


def _ln_channels_kernel(x_ref, g_ref, b_ref, o_ref):
    """x_ref / o_ref: (C, tile_rows, 128) or (C, tile_hw) VMEM block with C the
    leading (reduction) axis.  g_ref / b_ref: (C,) scalars in SMEM."""
    C = x_ref.shape[0]
    inv_c = 1.0 / C

    x = x_ref[...].astype(jnp.float32)
    # One-pass mean/variance: no `centered` full-tile temporary is kept live
    # across a reduction (reductions are materialization points).
    s = jnp.sum(x, axis=0, keepdims=True)                 # dense path: C-1 VPU adds
    ss = jnp.sum(x * x, axis=0, keepdims=True)
    mean = s * inv_c
    var = jnp.maximum(ss * inv_c - mean * mean, 0.0)      # clamp: cancellation safety
    inv = lax.rsqrt(var + EPS)                            # EUP, one rsqrt per pixel

    for c in range(C):                                    # static unroll; C is small
        g = g_ref[c].astype(jnp.float32)                  # SMEM scalar operands:
        b = b_ref[c].astype(jnp.float32)                  # no lane/sublane broadcasts
        y_c = (x[c:c + 1] - mean) * (inv * g) + b
        o_ref[pl.ds(c, 1)] = y_c.astype(o_ref.dtype)


def _round_up(v, m):
    return -(-v // m) * m


def _pick_tile(extent, unit, bytes_per_unit, target_block_bytes, n_batch, min_total_steps):
    """Largest `unit`-aligned tile over `extent` that (a) stays near the per-block
    byte budget and (b) keeps at least `min_total_steps` total grid steps, so the
    double-buffer pipeline has a steady state and both v7x TCs get work."""
    if extent <= unit:
        return extent                                      # full extent
    t = int(target_block_bytes // bytes_per_unit)
    t = max(unit, (t // unit) * unit)
    want_tiles = max(1, -(-min_total_steps // n_batch))    # tiles wanted along this axis
    t_cap = _round_up(max(1, -(-extent // want_tiles)), unit)
    t = min(t, t_cap)
    if t >= extent:
        return extent
    return t


def _vmem_limit_bytes(block_bytes, block_bytes_f32):
    # in + out double buffers, plus f32 intermediates inside the kernel, plus slack.
    need = 4 * block_bytes + 2 * block_bytes_f32 + (1 << 20)
    if need <= (16 << 20):          # fits every generation's scoped-VMEM default (v5e = 16 MiB)
        return None
    return int(min(need, 48 << 20))  # stay safely under v7x's 64 MiB physical VMEM


def layer_norm_channels(x, gamma, beta, *, target_block_bytes=2 << 20, min_total_steps=8):
    """LayerNormChannels forward: LayerNorm over the channel axis (axis 1) of an
    (N, C, *spatial) tensor.  Equivalent to permute -> nn.LayerNorm(C) -> permute
    back in the reference module (the permutes are layout-only; handled here by
    blocking, with zero XLA transposes)."""
    N, C = int(x.shape[0]), int(x.shape[1])
    HW = 1
    for d in x.shape[2:]:
        HW *= int(d)
    itemsize = jnp.dtype(x.dtype).itemsize
    gamma = gamma.reshape(C)
    beta = beta.reshape(C)

    smem_spec = pl.BlockSpec(memory_space=pltpu.MemorySpace.SMEM)

    cost = pl.CostEstimate(
        flops=8 * N * C * HW,
        transcendentals=N * HW,                           # one rsqrt per pixel
        bytes_accessed=2 * N * C * HW * itemsize + 2 * C * jnp.dtype(gamma.dtype).itemsize,
    )

    if HW % 128 == 0:
        # --- Dense path: channel reduce over a leading (non-vreg) axis. ---
        R = HW // 128
        x_in = x.reshape(N, C, R, 128)                    # free reshape (contiguous)
        tile_rows = _pick_tile(R, 8, C * 128 * itemsize,
                               target_block_bytes, N, min_total_steps)
        grid = (N, pl.cdiv(R, tile_rows))
        block = (pl.Squeezed(), C, tile_rows, 128)
        idx = lambda n, j: (n, 0, j, 0)
        block_bytes = C * tile_rows * 128 * itemsize      # fully dense, no padding
        block_bytes_f32 = C * tile_rows * 128 * 4
        out_shape = jax.ShapeDtypeStruct((N, C, R, 128), x.dtype)
    else:
        # --- Fallback (HW not lane-aligned): previous (C, tile_hw) layout.
        # Sublane-padded (C -> 8/16/32), XLU sublane reduce; same kernel body.
        x_in = x.reshape(N, C, HW)
        c_pad = _round_up(C, max(8, 32 // itemsize))      # true VMEM footprint per column
        tile_hw = _pick_tile(HW, 128, c_pad * itemsize,
                             target_block_bytes, N, min_total_steps)
        grid = (N, pl.cdiv(HW, tile_hw))
        block = (pl.Squeezed(), C, tile_hw)
        idx = lambda n, j: (n, 0, j)
        block_bytes = c_pad * tile_hw * itemsize
        block_bytes_f32 = c_pad * tile_hw * 4
        out_shape = jax.ShapeDtypeStruct((N, C, HW), x.dtype)

    y = pl.pallas_call(
        _ln_channels_kernel,
        out_shape=out_shape,
        grid_spec=pltpu.PrefetchScalarGridSpec(
            num_scalar_prefetch=0,
            grid=grid,
            in_specs=[pl.BlockSpec(block, idx), smem_spec, smem_spec],
            out_specs=pl.BlockSpec(block, idx),
        ),
        compiler_params=pltpu.CompilerParams(
            dimension_semantics=("parallel", "parallel"),
            vmem_limit_bytes=_vmem_limit_bytes(block_bytes, block_bytes_f32),
        ),
        cost_estimate=cost,
    )(x_in, gamma, beta)

    return y.reshape(x.shape)


def _reference(x, gamma, beta):
    C = x.shape[1]
    mean = jnp.mean(x, axis=1, keepdims=True)
    var = jnp.mean((x - mean) ** 2, axis=1, keepdims=True)
    bshape = (1, C) + (1,) * (x.ndim - 2)
    return (x - mean) / jnp.sqrt(var + EPS) * gamma.reshape(bshape) + beta.reshape(bshape)


if __name__ == "__main__":
    key = jax.random.PRNGKey(0)
    kx, kg, kb, kx2 = jax.random.split(key, 4)

    N, C = 2, 4
    # nn.LayerNorm(c_in) affine params, perturbed so the affine path is exercised.
    gamma = jnp.ones((C,), jnp.float32) + 0.1 * jax.random.normal(kg, (C,), jnp.float32)
    beta = 0.1 * jax.random.normal(kb, (C,), jnp.float32)

    # 1) Dense (lane-aligned) path: H*W = 256 is a multiple of 128.
    x = jax.random.normal(kx, (N, C, 16, 16), dtype=jnp.float32)
    y = jax.block_until_ready(layer_norm_channels(x, gamma, beta))
    assert y.shape == x.shape and y.dtype == x.dtype
    assert jnp.max(jnp.abs(y - _reference(x, gamma, beta))) < 1e-4, "dense path mismatch"

    # 2) Fallback path: H*W = 144 is not a multiple of 128.
    x2 = jax.random.normal(kx2, (N, C, 12, 12), dtype=jnp.float32)
    y2 = jax.block_until_ready(layer_norm_channels(x2, gamma, beta))
    assert y2.shape == x2.shape and y2.dtype == x2.dtype
    assert jnp.max(jnp.abs(y2 - _reference(x2, gamma, beta))) < 1e-4, "fallback path mismatch"

    print("KERNEL_OK")
</pallas_src>

<mosaic_0001>
module attributes {stable_mosaic.version = 11 : i64} {
  func.func @_ln_channels_kernel(%arg0: i32, %arg1: i32, %arg2: memref<1x4x2x128xf32, #tpu.memory_space<vmem>>, %arg3: memref<4xf32, #tpu.memory_space<smem>>, %arg4: memref<4xf32, #tpu.memory_space<smem>>, %arg5: memref<1x4x2x128xf32, #tpu.memory_space<vmem>>) attributes {dimension_semantics = [#tpu.dimension_semantics<parallel>, #tpu.dimension_semantics<parallel>], iteration_bounds = array<i64: 2, 1>, scalar_prefetch = 0 : i64, scratch_operands = 0 : i64, tpu.core_type = #tpu.core_type<tc>, window_params = [{transform_indices = @transform_0, window_bounds = array<i64: 1, 4, 2, 128>}, {transform_indices = @transform_1, window_bounds = array<i64: 4>}, {transform_indices = @transform_2, window_bounds = array<i64: 4>}, {transform_indices = @transform_3, window_bounds = array<i64: 1, 4, 2, 128>}]} {
    %c0 = arith.constant 0 : index
    %c0_0 = arith.constant 0 : index
    %c0_1 = arith.constant 0 : index
    %c0_2 = arith.constant 0 : index
    %0 = vector.load %arg2[%c0, %c0_0, %c0_1, %c0_2] : memref<1x4x2x128xf32, #tpu.memory_space<vmem>>, vector<1x4x2x128xf32>
    %1 = vector.shape_cast %0 : vector<1x4x2x128xf32> to vector<4x2x128xf32>
    %cst = arith.constant dense<0.000000e+00> : vector<2x128xf32>
    %2 = vector.multi_reduction <add>, %1, %cst [0] : vector<4x2x128xf32> to vector<2x128xf32>
    %3 = vector.shape_cast %2 : vector<2x128xf32> to vector<1x2x128xf32>
    %4 = arith.mulf %1, %1 : vector<4x2x128xf32>
    %cst_3 = arith.constant dense<0.000000e+00> : vector<2x128xf32>
    %5 = vector.multi_reduction <add>, %4, %cst_3 [0] : vector<4x2x128xf32> to vector<2x128xf32>
    %6 = vector.shape_cast %5 : vector<2x128xf32> to vector<1x2x128xf32>
    %cst_4 = arith.constant 2.500000e-01 : f32
    %7 = vector.broadcast %cst_4 : f32 to vector<1x2x128xf32>
    %8 = arith.mulf %3, %7 : vector<1x2x128xf32>
    %cst_5 = arith.constant 2.500000e-01 : f32
    %9 = vector.broadcast %cst_5 : f32 to vector<1x2x128xf32>
    %10 = arith.mulf %6, %9 : vector<1x2x128xf32>
    %11 = arith.mulf %8, %8 : vector<1x2x128xf32>
    %12 = arith.subf %10, %11 : vector<1x2x128xf32>
    %cst_6 = arith.constant 0.000000e+00 : f32
    %13 = vector.broadcast %cst_6 : f32 to vector<1x2x128xf32>
    %14 = arith.maximumf %12, %13 : vector<1x2x128xf32>
    %cst_7 = arith.constant 9.99999974E-6 : f32
    %15 = vector.broadcast %cst_7 : f32 to vector<1x2x128xf32>
    %16 = arith.addf %14, %15 : vector<1x2x128xf32>
    %17 = math.rsqrt %16 : vector<1x2x128xf32>
    %c0_8 = arith.constant 0 : index
    %18 = memref.load %arg3[%c0_8] : memref<4xf32, #tpu.memory_space<smem>>
    %c0_9 = arith.constant 0 : index
    %19 = memref.load %arg4[%c0_9] : memref<4xf32, #tpu.memory_space<smem>>
    %20 = vector.extract_strided_slice %1 {offsets = [0, 0, 0], sizes = [1, 2, 128], strides = [1, 1, 1]} : vector<4x2x128xf32> to vector<1x2x128xf32>
    %21 = arith.subf %20, %8 : vector<1x2x128xf32>
    %22 = vector.broadcast %18 : f32 to vector<1x2x128xf32>
    %23 = arith.mulf %17, %22 : vector<1x2x128xf32>
    %24 = arith.mulf %21, %23 : vector<1x2x128xf32>
    %25 = vector.broadcast %19 : f32 to vector<1x2x128xf32>
    %26 = arith.addf %24, %25 : vector<1x2x128xf32>
    %c0_10 = arith.constant 0 : index
    %c0_11 = arith.constant 0 : index
    %c0_12 = arith.constant 0 : index
    %c0_13 = arith.constant 0 : index
    %27 = vector.load %arg5[%c0_10, %c0_11, %c0_12, %c0_13] : memref<1x4x2x128xf32, #tpu.memory_space<vmem>>, vector<1x1x2x128xf32>
    %28 = vector.shape_cast %27 : vector<1x1x2x128xf32> to vector<1x2x128xf32>
    %29 = vector.shape_cast %26 : vector<1x2x128xf32> to vector<1x1x2x128xf32>
    tpu.vector_store %arg5[%c0_10, %c0_11, %c0_12, %c0_13], %29 {strides = array<i32>} : memref<1x4x2x128xf32, #tpu.memory_space<vmem>>, vector<1x1x2x128xf32>,
    %c1 = arith.constant 1 : index
    %30 = memref.load %arg3[%c1] : memref<4xf32, #tpu.memory_space<smem>>
    %c1_14 = arith.constant 1 : index
    %31 = memref.load %arg4[%c1_14] : memref<4xf32, #tpu.memory_space<smem>>
    %32 = vector.extract_strided_slice %1 {offsets = [1, 0, 0], sizes = [1, 2, 128], strides = [1, 1, 1]} : vector<4x2x128xf32> to vector<1x2x128xf32>
    %33 = arith.subf %32, %8 : vector<1x2x128xf32>
    %34 = vector.broadcast %30 : f32 to vector<1x2x128xf32>
    %35 = arith.mulf %17, %34 : vector<1x2x128xf32>
    %36 = arith.mulf %33, %35 : vector<1x2x128xf32>
    %37 = vector.broadcast %31 : f32 to vector<1x2x128xf32>
    %38 = arith.addf %36, %37 : vector<1x2x128xf32>
    %c0_15 = arith.constant 0 : index
    %c1_16 = arith.constant 1 : index
    %c0_17 = arith.constant 0 : index
    %c0_18 = arith.constant 0 : index
    %39 = vector.load %arg5[%c0_15, %c1_16, %c0_17, %c0_18] : memref<1x4x2x128xf32, #tpu.memory_space<vmem>>, vector<1x1x2x128xf32>
    %40 = vector.shape_cast %39 : vector<1x1x2x128xf32> to vector<1x2x128xf32>
    %41 = vector.shape_cast %38 : vector<1x2x128xf32> to vector<1x1x2x128xf32>
    tpu.vector_store %arg5[%c0_15, %c1_16, %c0_17, %c0_18], %41 {strides = array<i32>} : memref<1x4x2x128xf32, #tpu.memory_space<vmem>>, vector<1x1x2x128xf32>,
    %c2 = arith.constant 2 : index
    %42 = memref.load %arg3[%c2] : memref<4xf32, #tpu.memory_space<smem>>
    %c2_19 = arith.constant 2 : index
    %43 = memref.load %arg4[%c2_19] : memref<4xf32, #tpu.memory_space<smem>>
    %44 = vector.extract_strided_slice %1 {offsets = [2, 0, 0], sizes = [1, 2, 128], strides = [1, 1, 1]} : vector<4x2x128xf32> to vector<1x2x128xf32>
    %45 = arith.subf %44, %8 : vector<1x2x128xf32>
    %46 = vector.broadcast %42 : f32 to vector<1x2x128xf32>
    %47 = arith.mulf %17, %46 : vector<1x2x128xf32>
    %48 = arith.mulf %45, %47 : vector<1x2x128xf32>
    %49 = vector.broadcast %43 : f32 to vector<1x2x128xf32>
    %50 = arith.addf %48, %49 : vector<1x2x128xf32>
    %c0_20 = arith.constant 0 : index
    %c2_21 = arith.constant 2 : index
    %c0_22 = arith.constant 0 : index
    %c0_23 = arith.constant 0 : index
    %51 = vector.load %arg5[%c0_20, %c2_21, %c0_22, %c0_23] : memref<1x4x2x128xf32, #tpu.memory_space<vmem>>, vector<1x1x2x128xf32>
    %52 = vector.shape_cast %51 : vector<1x1x2x128xf32> to vector<1x2x128xf32>
    %53 = vector.shape_cast %50 : vector<1x2x128xf32> to vector<1x1x2x128xf32>
    tpu.vector_store %arg5[%c0_20, %c2_21, %c0_22, %c0_23], %53 {strides = array<i32>} : memref<1x4x2x128xf32, #tpu.memory_space<vmem>>, vector<1x1x2x128xf32>,
    %c3 = arith.constant 3 : index
    %54 = memref.load %arg3[%c3] : memref<4xf32, #tpu.memory_space<smem>>
    %c3_24 = arith.constant 3 : index
    %55 = memref.load %arg4[%c3_24] : memref<4xf32, #tpu.memory_space<smem>>
    %56 = vector.extract_strided_slice %1 {offsets = [3, 0, 0], sizes = [1, 2, 128], strides = [1, 1, 1]} : vector<4x2x128xf32> to vector<1x2x128xf32>
    %57 = arith.subf %56, %8 : vector<1x2x128xf32>
    %58 = vector.broadcast %54 : f32 to vector<1x2x128xf32>
    %59 = arith.mulf %17, %58 : vector<1x2x128xf32>
    %60 = arith.mulf %57, %59 : vector<1x2x128xf32>
    %61 = vector.broadcast %55 : f32 to vector<1x2x128xf32>
    %62 = arith.addf %60, %61 : vector<1x2x128xf32>
    %c0_25 = arith.constant 0 : index
    %c3_26 = arith.constant 3 : index
    %c0_27 = arith.constant 0 : index
    %c0_28 = arith.constant 0 : index
    %63 = vector.load %arg5[%c0_25, %c3_26, %c0_27, %c0_28] : memref<1x4x2x128xf32, #tpu.memory_space<vmem>>, vector<1x1x2x128xf32>
    %64 = vector.shape_cast %63 : vector<1x1x2x128xf32> to vector<1x2x128xf32>
    %65 = vector.shape_cast %62 : vector<1x2x128xf32> to vector<1x1x2x128xf32>
    tpu.vector_store %arg5[%c0_25, %c3_26, %c0_27, %c0_28], %65 {strides = array<i32>} : memref<1x4x2x128xf32, #tpu.memory_space<vmem>>, vector<1x1x2x128xf32>,
    return
  }
  func.func @transform_0(%arg0: i32, %arg1: i32) -> (i32, i32, i32, i32) {
    %c0_i32 = arith.constant 0 : i32
    %c0_i32_0 = arith.constant 0 : i32
    %c0_i32_1 = arith.constant 0 : i32
    return %arg0, %c0_i32, %arg1, %c0_i32_0 : i32, i32, i32, i32
  }
  func.func @transform_1(%arg0: i32, %arg1: i32) -> i32 {
    %c0_i32 = arith.constant 0 : i32
    %c0_i32_0 = arith.constant 0 : i32
    return %c0_i32 : i32
  }
  func.func @transform_2(%arg0: i32, %arg1: i32) -> i32 {
    %c0_i32 = arith.constant 0 : i32
    %c0_i32_0 = arith.constant 0 : i32
    return %c0_i32 : i32
  }
  func.func @transform_3(%arg0: i32, %arg1: i32) -> (i32, i32, i32, i32) {
    %c0_i32 = arith.constant 0 : i32
    %c0_i32_0 = arith.constant 0 : i32
    %c0_i32_1 = arith.constant 0 : i32
    return %arg0, %c0_i32, %arg1, %c0_i32_0 : i32, i32, i32, i32
  }
}

</mosaic_0001>

<llo_original>
// kernel: tpu_custom_call.1
$region0: #{tpu_custom_call.1}
  #allocation0 [shape = 'u32[]', space=smem, size = 0x4, offset = 0x4, fixed_abs, tag = 'smem constant byte address 0x4 - core index']
  #allocation1 [shape = 'u32[144,128]{1,0:T(1,128)}', space=vmem, size = 0x12000, scoped, tag = 'internal scratch']
  %s0 = inlined_call_operand.hbm [shape: f32[2,4,2,128], index: 0, kind: input, shape index: {}]
  %s1 = inlined_call_operand.vmem [shape: f32[4], index: 1, kind: input, shape index: {}]
  %s2 = inlined_call_operand.vmem [shape: f32[4], index: 2, kind: input, shape index: {}]
  %s3 = inlined_call_operand.hbm [shape: f32[2,4,2,128], index: 3, kind: output, shape index: {}]
  %s4 = sld [smem:[#allocation0]]
  $region57: #{tpu_custom_call.1} parent=0
    _
  %s6 = ssub.s32 1, %s4
  %s7 = scalar_select 0, %s6, %s4
  $region1: #{tpu_custom_call.1} parent=0
    #allocation2 [shape = 'u8[8192]{0}', space=vmem, size = 0x2000, scoped, tag = 'input window, operand 0']
    #allocation3 [shape = 's32[2]{0}', space=sflag, size = 0x8, scoped, tag = 'scoped memory for tpu_custom_call.1']
    #allocation4 [shape = 's32[2]{0}', space=sflag, size = 0x8, scoped, tag = 'scoped memory for tpu_custom_call.1']
    #allocation5 [shape = 's32[2]{0}', space=sflag, size = 0x8, scoped, tag = 'scoped memory for tpu_custom_call.1']
    #allocation6 [shape = 'u8[512]{0}', space=smem, size = 0x200, scoped, tag = 'input window, operand 1, single buffered']
    #allocation7 [shape = 'u8[512]{0}', space=smem, size = 0x200, scoped, tag = 'input window, operand 2, single buffered']
    #allocation8 [shape = 's32[1]{0}', space=sflag, size = 0x4, scoped, tag = 'scoped memory for tpu_custom_call.1']
    #allocation9 [shape = 'u8[8192]{0}', space=vmem, size = 0x2000, scoped, tag = 'output window, operand 0']
    %8 = vsyncpa [#allocation3], 0
    %s9 = scalar_lea.sflag [#allocation3], 1
    %10 = vsyncpa %s9, 0
    %11 = vsyncpa [#allocation5], 0
    %12 = vsyncpa [#allocation8], 0
    %13 = vsyncpa [#allocation4], 0
    %s14 = scalar_lea.sflag [#allocation4], 1
    %15 = vsyncpa %s14, 0
    loop: start=0, step=1, limit=4
    $region2: #{tpu_custom_call.1} parent=1 // loop_pre_header
      _
    $region3: #{tpu_custom_call.1} parent=1 // loop_header
      %s17 = sphi 0, %s21
      %p18 = scmp.ge.s32.totalorder %s17, 4
      %s24 = sphi 0, %s36
      %s25 = sphi 0, %s32
      %s26 = sphi 0, %s24
      %s27 = sphi 0, %s25
      %s28 = sphi 0, %s26
      %s29 = sphi 0, %s27
      %s41 = sphi 0, %s43
      %s44 = sphi 0, %s41
      %s45 = sphi 0, %s44
      %s61 = sphi 0, %s45
      %s65 = sphi 0, %s65
      %s67 = sphi 0, %s65
      %s68 = sphi 0, %s67
      %s82 = sphi 0, %s68
      %s86 = sphi 0, %s86
      %s88 = sphi 0, %s86
      %s89 = sphi 0, %s88
      %s103 = sphi 0, %s89
      %s111 = sphi 0, %s113
      %s114 = sphi 0, %s111
      %s115 = sphi 0, %s114
      %s131 = sphi 0, %s115
    $region4: #{tpu_custom_call.1} parent=1 // loop_header_branch
      %20 = sbr.rel (%p18) target = $region8
    $region5: #{tpu_custom_call.1} parent=1 // loop_body
      %s22 = ssub.s32 %s17, 1
      %s23 = ssub.s32 %s17, 2
      %s30 = sadd.s32 1, %s25
      %p31 = scmp.ge.s32.totalorder %s30, 1
      %s32 = scalar_select %p31, 0, %s30
      %s33 = sadd.s32 1, %s24
      %s34 = scalar_select %p31, %s33, %s24
      %p35 = scmp.ge.s32.totalorder %s34, 2
      %s36 = scalar_select %p35, 0, %s34
      %s37 = ssub.s32 %s24, %s36
      %s38 = ssub.s32 %s25, %s32
      %s39 = sor.u32 %s37, %s38
      %p40 = scmp.eq.s32.totalorder %s39, 0
      %s42 = sadd.s32 %s41, 1
      %s43 = scalar_select %p40, %s41, %s42
      %p46 = pneg %p40
      %p47 = scmp.eq.s32.totalorder %s17, 1
      %p48 = por %p46, %p47
      %p49 = scmp.ne.s32.totalorder %s41, %s44
      %p50 = scmp.eq.s32.totalorder %s17, 0
      %p51 = por %p49, %p50
      %p52 = scmp.ne.s32.totalorder %s41, %s44
      %p53 = scmp.eq.s32.totalorder %s22, 1
      %p54 = por %p52, %p53
      %p55 = scmp.ne.s32.totalorder %s44, %s45
      %p56 = scmp.eq.s32.totalorder %s22, 0
      %p57 = por %p55, %p56
      %p58 = scmp.ne.s32.totalorder %s44, %s45
      %p59 = scmp.eq.s32.totalorder %s23, 1
      %p60 = por %p58, %p59
      %p62 = scmp.ne.s32.totalorder %s45, %s61
      %p63 = scmp.eq.s32.totalorder %s23, 0
      %p64 = por %p62, %p63
      %s66 = sadd.s32 %s65, 1
      %p69 = scmp.eq.s32.totalorder %s17, 1
      %p70 = scmp.ne.s32.totalorder %s65, %s67
      %p71 = scmp.eq.s32.totalorder %s17, 0
      %p72 = por %p70, %p71
      %p73 = scmp.ne.s32.totalorder %s65, %s67
      %p74 = scmp.eq.s32.totalorder %s22, 1
      %p75 = por %p73, %p74
      %p76 = scmp.ne.s32.totalorder %s67, %s68
      %p77 = scmp.eq.s32.totalorder %s22, 0
      %p78 = por %p76, %p77
      %p79 = scmp.ne.s32.totalorder %s67, %s68
      %p80 = scmp.eq.s32.totalorder %s23, 1
      %p81 = por %p79, %p80
      %p83 = scmp.ne.s32.totalorder %s68, %s82
      %p84 = scmp.eq.s32.totalorder %s23, 0
      %p85 = por %p83, %p84
      %s87 = sadd.s32 %s86, 1
      %p90 = scmp.eq.s32.totalorder %s17, 1
      %p91 = scmp.ne.s32.totalorder %s86, %s88
      %p92 = scmp.eq.s32.totalorder %s17, 0
      %p93 = por %p91, %p92
      %p94 = scmp.ne.s32.totalorder %s86, %s88
      %p95 = scmp.eq.s32.totalorder %s22, 1
      %p96 = por %p94, %p95
      %p97 = scmp.ne.s32.totalorder %s88, %s89
      %p98 = scmp.eq.s32.totalorder %s22, 0
      %p99 = por %p97, %p98
      %p100 = scmp.ne.s32.totalorder %s88, %s89
      %p101 = scmp.eq.s32.totalorder %s23, 1
      %p102 = por %p100, %p101
      %p104 = scmp.ne.s32.totalorder %s89, %s103
      %p105 = scmp.eq.s32.totalorder %s23, 0
      %p106 = por %p104, %p105
      %s107 = ssub.s32 %s24, %s36
      %s108 = ssub.s32 %s25, %s32
      %s109 = sor.u32 %s107, %s108
      %p110 = scmp.eq.s32.totalorder %s109, 0
      %s112 = sadd.s32 %s111, 1
      %s113 = scalar_select %p110, %s111, %s112
      %p116 = pneg %p110
      %p117 = scmp.eq.s32.totalorder %s17, 1
      %p118 = por %p116, %p117
      %p119 = scmp.ne.s32.totalorder %s111, %s114
      %p120 = scmp.eq.s32.totalorder %s17, 0
      %p121 = por %p119, %p120
      %p122 = scmp.ne.s32.totalorder %s111, %s114
      %p123 = scmp.eq.s32.totalorder %s22, 1
      %p124 = por %p122, %p123
      %p125 = scmp.ne.s32.totalorder %s114, %s115
      %p126 = scmp.eq.s32.totalorder %s22, 0
      %p127 = por %p125, %p126
      %p128 = scmp.ne.s32.totalorder %s114, %s115
      %p129 = scmp.eq.s32.totalorder %s23, 1
      %p130 = por %p128, %p129
      %p132 = scmp.ne.s32.totalorder %s115, %s131
      %p133 = scmp.eq.s32.totalorder %s23, 0
      %p134 = por %p132, %p133
      %p135 = scmp.le.s32.totalorder 1, %s17
      %p136 = scmp.lt.s32.totalorder %s17, 3
      %p137 = pnand %p135, %p136
      %p138 = pneg %p137
      // Predicated region
      $region9: #{tpu_custom_call.1} parent=5 // pred_check
        _
      $region10: #{tpu_custom_call.1} parent=5 // pred_check_branch
        %140 = sbr.rel (%p137) target = $region12
      $region11: #{tpu_custom_call.1} parent=5 // pred_region
        %s141 = ssub.s32 %s17, 1
        // Predicated region
        $region13: #{tpu_custom_call.1} parent=11 // pred_check
          %p142 = pneg %p78
        $region14: #{tpu_custom_call.1} parent=11 // pred_check_branch
          %144 = sbr.rel (%p142) target = $region16
        $region15: #{tpu_custom_call.1} parent=11 // pred_region
          %s146 = ssub.s32 16, 16
          %147 = vsyncadd [#allocation5], %s146
          %s149 = sshll.u32 %s1, 4
          %s150 = int_to_ptr.vmem [resolvable:$true] %s149
          %152 = dma.vmem_to_smem %s150, 16, [#allocation6], [#allocation5]
        $region16: #{tpu_custom_call.1} parent=11 // pred_fallthru
          _
        // Predicated region
        $region17: #{tpu_custom_call.1} parent=11 // pred_check
          %p153 = pneg %p99
        $region18: #{tpu_custom_call.1} parent=11 // pred_check_branch
          %155 = sbr.rel (%p153) target = $region20
        $region19: #{tpu_custom_call.1} parent=11 // pred_region
          %s157 = ssub.s32 16, 16
          %158 = vsyncadd [#allocation8], %s157
          %s160 = sshll.u32 %s2, 4
          %s161 = int_to_ptr.vmem [resolvable:$true] %s160
          %163 = dma.vmem_to_smem %s161, 16, [#allocation7], [#allocation8]
        $region20: #{tpu_custom_call.1} parent=11 // pred_fallthru
          _
      $region12: #{tpu_custom_call.1} parent=5 // pred_fallthru
        _
      %p164 = scmp.lt.s32.totalorder %s17, 2
      // Predicated region
      $region21: #{tpu_custom_call.1} parent=5 // pred_check
        %p165 = pneg %p164
      $region22: #{tpu_custom_call.1} parent=5 // pred_check_branch
        %167 = sbr.rel (%p165) target = $region24
      $region23: #{tpu_custom_call.1} parent=5 // pred_region
        // Predicated region
        $region25: #{tpu_custom_call.1} parent=23 // pred_check
          %p168 = pneg %p51
        $region26: #{tpu_custom_call.1} parent=23 // pred_check_branch
          %170 = sbr.rel (%p168) target = $region28
        $region27: #{tpu_custom_call.1} parent=23 // pred_region
          %s171 = sand.u32 %s41, 1
          %s172 = scalar_lea.sflag [#allocation3], %s171
          %s173 = sand.u32 %s41, 1
          %s174 = smul.addr %s173, 8
          %s175 = scalar_lea.vmem [#allocation2], %s174
          %s177 = ssub.s32 128, 128
          %178 = vsyncadd %s172, %s177
          %s179 = smul.addr %s24, 4
          %s180 = sadd.s32 %s25, %s179
          %s181 = smul.addr %s180, 32
          %s182 = scalar_lea.hbm %s0, %s181
          %s183 = sshll.u32 %s175, 4
          %s184 = int_to_ptr.vmem [resolvable:$true] %s183
          %189 = dma.hbm_to_vmem [thread:$0]  %s182, 128, %s184, %s172, 32, 32, 2
        $region28: #{tpu_custom_call.1} parent=23 // pred_fallthru
          _
      $region24: #{tpu_custom_call.1} parent=5 // pred_fallthru
        _
      %p190 = scmp.le.s32.totalorder 1, %s17
      %p191 = scmp.lt.s32.totalorder %s17, 3
      %p192 = pnand %p190, %p191
      %p193 = pneg %p192
      // Predicated region
      $region29: #{tpu_custom_call.1} parent=5 // pred_check
        _
      $region30: #{tpu_custom_call.1} parent=5 // pred_check_branch
        %195 = sbr.rel (%p192) target = $region32
      $region31: #{tpu_custom_call.1} parent=5 // pred_region
        %s196 = ssub.s32 %s17, 1
        %s197 = sand.u32 %s44, 1
        %s198 = scalar_lea.sflag [#allocation3], %s197
        %s199 = sand.u32 %s44, 1
        %s200 = smul.addr %s199, 8
        %s201 = scalar_lea.vmem [#allocation2], %s200
        // Predicated region
        $region33: #{tpu_custom_call.1} parent=31 // pred_check
          %p202 = pneg %p57
        $region34: #{tpu_custom_call.1} parent=31 // pred_check_branch
          %204 = sbr.rel (%p202) target = $region36
        $region35: #{tpu_custom_call.1} parent=31 // pred_region
          %205 = dma.done %s198, 128
        $region36: #{tpu_custom_call.1} parent=31 // pred_fallthru
          _
        // Predicated region
        $region37: #{tpu_custom_call.1} parent=31 // pred_check
          %p206 = pneg %p78
        $region38: #{tpu_custom_call.1} parent=31 // pred_check_branch
          %208 = sbr.rel (%p206) target = $region40
        $region39: #{tpu_custom_call.1} parent=31 // pred_region
          %209 = dma.done [#allocation5], 16
        $region40: #{tpu_custom_call.1} parent=31 // pred_fallthru
          _
        // Predicated region
        $region41: #{tpu_custom_call.1} parent=31 // pred_check
          %p210 = pneg %p99
        $region42: #{tpu_custom_call.1} parent=31 // pred_check_branch
          %212 = sbr.rel (%p210) target = $region44
        $region43: #{tpu_custom_call.1} parent=31 // pred_region
          %213 = dma.done [#allocation8], 16
        $region44: #{tpu_custom_call.1} parent=31 // pred_fallthru
          _
        %214 = sfence
        %s215 = sand.u32 %s44, 1
        %s216 = scalar_lea.sflag [#allocation3], %s215
        %s217 = sand.u32 %s44, 1
        %s218 = smul.addr %s217, 8
        %s219 = scalar_lea.vmem [#allocation2], %s218
        %p220 = pneg %p57
        %p221 = pneg %p54
        %p222 = pneg %p78
        %p223 = pneg %p75
        %p224 = pneg %p99
        %p225 = pneg %p96
        %p226 = pneg %p127
        %p227 = pneg %p124
        %s228 = sand.u32 %s114, 1
        %s229 = scalar_lea.sflag [#allocation4], %s228
        %s230 = sand.u32 %s114, 1
        %s231 = smul.addr %s230, 8
        %s232 = scalar_lea.vmem [#allocation9], %s231
        %v233 = vld [vmem:[%s201] sm:$0x3]
        %v234 = vld [vmem:[%s201 + $0x2] sm:$0x3]
        %v235 = vld [vmem:[%s201 + $0x4] sm:$0x3]
        %v236 = vld [vmem:[%s201 + $0x6] sm:$0x3]
        %vm237 = vcmask 1041408
        %v238 = vsel %vm237, %v233, 0.0
        %v239 = vsel %vm237, %v234, 0.0
        %v240 = vadd.f32 %v238, %v239
        %v241 = vsel %vm237, %v235, 0.0
        %v242 = vadd.f32 %v240, %v241
        %v243 = vsel %vm237, %v236, 0.0
        %v244 = vadd.f32 %v242, %v243
        %v245 = vmul.f32 %v233, %v233
        %v246 = vmul.f32 %v234, %v234
        %v247 = vmul.f32 %v235, %v235
        %v248 = vmul.f32 %v236, %v236
        %v249 = vsel %vm237, %v245, 0.0
        %v250 = vsel %vm237, %v246, 0.0
        %v251 = vadd.f32 %v249, %v250
        %v252 = vsel %vm237, %v247, 0.0
        %v253 = vadd.f32 %v251, %v252
        %v254 = vsel %vm237, %v248, 0.0
        %v255 = vadd.f32 %v253, %v254
        %v256 = vmul.f32 %v244, 0.25
        %v257 = vmul.f32 %v255, 0.25
        %v258 = vmul.f32 %v256, %v256
        %v259 = vsub.f32 %v257, %v258
        %v260 = vmax.f32 %v259, 0.0
        %v261 = vadd.f32 %v260, 1e-05
        %v262 = vrsqrt.pop %v261
        %s263 = sld [smem:[#allocation6]]
        %s264 = sld [smem:[#allocation7]]
        %v265 = vsub.f32 %v233, %v256
        %v266 = vstv %s263
        %v267 = vmul.f32 %v262, %v266
        %v268 = vmul.f32 %v265, %v267
        %v269 = vstv %s264
        %v270 = vadd.f32 %v268, %v269
        %271 = vst [vmem:[%s232] sm:$0x3] %v270
        %s272 = sld [smem:[#allocation6 + $0x1]]
        %s273 = sld [smem:[#allocation7 + $0x1]]
        %v274 = vsub.f32 %v234, %v256
        %v275 = vstv %s272
        %v276 = vmul.f32 %v262, %v275
        %v277 = vmul.f32 %v274, %v276
        %v278 = vstv %s273
        %v279 = vadd.f32 %v277, %v278
        %s280 = scalar_lea.vmem %s232, 2 [#allocation9]
        %281 = vst [vmem:[%s280] sm:$0x3] %v279
        %s282 = sld [smem:[#allocation6 + $0x2]]
        %s283 = sld [smem:[#allocation7 + $0x2]]
        %v284 = vsub.f32 %v235, %v256
        %v285 = vstv %s282
        %v286 = vmul.f32 %v262, %v285
        %v287 = vmul.f32 %v284, %v286
        %v288 = vstv %s283
        %v289 = vadd.f32 %v287, %v288
        %s290 = scalar_lea.vmem %s232, 4 [#allocation9]
        %291 = vst [vmem:[%s290] sm:$0x3] %v289
        %s292 = sld [smem:[#allocation6 + $0x3]]
        %s293 = sld [smem:[#allocation7 + $0x3]]
        %v294 = vsub.f32 %v236, %v256
        %v295 = vstv %s292
        %v296 = vmul.f32 %v262, %v295
        %v297 = vmul.f32 %v294, %v296
        %v298 = vstv %s293
        %v299 = vadd.f32 %v297, %v298
        %s300 = scalar_lea.vmem %s232, 6 [#allocation9]
        %301 = vst [vmem:[%s300] sm:$0x3] %v299
        %s302 = sand.u32 %s114, 1
        %s303 = scalar_lea.sflag [#allocation4], %s302
        %s304 = sand.u32 %s114, 1
        %s305 = smul.addr %s304, 8
        %s306 = scalar_lea.vmem [#allocation9], %s305
        // Predicated region
        $region45: #{tpu_custom_call.1} parent=31 // pred_check
          %p307 = pneg %p124
        $region46: #{tpu_custom_call.1} parent=31 // pred_check_branch
          %309 = sbr.rel (%p307) target = $region48
        $region47: #{tpu_custom_call.1} parent=31 // pred_region
          %s311 = ssub.s32 128, 128
          %312 = vsyncadd %s303, %s311
          %s313 = smul.addr %s26, 4
          %s314 = sadd.s32 %s27, %s313
          %s315 = smul.addr %s314, 32
          %s316 = scalar_lea.hbm %s3, %s315
          %s317 = sshll.u32 %s306, 4
          %s318 = int_to_ptr.vmem [resolvable:$true] %s317
          %323 = dma.vmem_to_hbm [thread:$0]  %s318, 128, %s316, %s303, 32, 32, 2
        $region48: #{tpu_custom_call.1} parent=31 // pred_fallthru
          _
      $region32: #{tpu_custom_call.1} parent=5 // pred_fallthru
        _
      %p324 = scmp.le.s32.totalorder 2, %s17
      // Predicated region
      $region49: #{tpu_custom_call.1} parent=5 // pred_check
        %p325 = pneg %p324
      $region50: #{tpu_custom_call.1} parent=5 // pred_check_branch
        %327 = sbr.rel (%p325) target = $region52
      $region51: #{tpu_custom_call.1} parent=5 // pred_region
        %s328 = ssub.s32 %s17, 2
        // Predicated region
        $region53: #{tpu_custom_call.1} parent=51 // pred_check
          %p329 = pneg %p130
        $region54: #{tpu_custom_call.1} parent=51 // pred_check_branch
          %331 = sbr.rel (%p329) target = $region56
        $region55: #{tpu_custom_call.1} parent=51 // pred_region
          %s332 = sand.u32 %s115, 1
          %s333 = scalar_lea.sflag [#allocation4], %s332
          %s334 = sand.u32 %s115, 1
          %s335 = smul.addr %s334, 8
          %s336 = scalar_lea.vmem [#allocation9], %s335
          %337 = dma.done %s333, 128
        $region56: #{tpu_custom_call.1} parent=51 // pred_fallthru
          _
      $region52: #{tpu_custom_call.1} parent=5 // pred_fallthru
        _
    $region6: #{tpu_custom_call.1} parent=1 // loop_footer
      %s21 = sadd.s32 1, %s17
    $region7: #{tpu_custom_call.1} parent=1 // loop_footer_branch
      %16 = sbr.rel target = $region3
    $region8: #{tpu_custom_call.1} parent=1 // loop_exit
      _
    %338 = vsyncpa [#allocation3], 1
    %s339 = scalar_lea.sflag [#allocation3], 1
    %340 = vsyncpa %s339, 1
    %341 = vsyncpa [#allocation4], 1
    %s342 = scalar_lea.sflag [#allocation4], 1
    %343 = vsyncpa %s342, 1
    %344 = vsyncpa [#allocation5], 1
    %s345 = scalar_lea.sflag [#allocation5], 1
    %346 = vsyncpa %s345, 1
    %347 = vsyncpa [#allocation8], 1

</llo_original>
